<compile_context>
chip_gen: v7x
topology: tpu7x:2x2x1
jax: 0.10.0
libtpu: 0.0.40
codegen_flags: <defaults>
</compile_context>

<pallas_src>
import jax
import jax.numpy as jnp
from jax.experimental import pallas as pl
from jax.experimental.pallas import tpu as pltpu


def _round_up(x, m):
    return (x + m - 1) // m * m


def _leaky_relu(x, slope=0.2):
    return jnp.where(x > 0, x, slope * x)


def discriminator_mlp_kernel(xe_ref, xa_ref, w1e_ref, w1a_ref,
                             w_ref, b_ref, o_ref):
    """Fused 4-layer MLP: (Linear + LeakyReLU) x3 -> Linear -> Sigmoid.

    xe_ref:  (tm, E)     tile of encoded rows                      (VMEM)
    xa_ref:  (tm, A)     tile of future_action rows                (VMEM)
    w1e_ref: (E, HP)     first-layer weight rows for encoded       (VMEM, padded)
    w1a_ref: (A, HP)     first-layer weight rows for future_action (VMEM, padded)
    w_ref:   (3, HP, HP) stacked zero-padded w2, w3, w4            (VMEM)
    b_ref:   (4, HP)     stacked zero-padded b1..b4                (VMEM)
    o_ref:   (tm, HP)    lane-dense output tile (column 0 = logit) (VMEM)
    """
    # Dropout layers are identity in eval mode (see module docstring).
    h = (jnp.dot(xe_ref[...], w1e_ref[...], preferred_element_type=jnp.float32)
         + jnp.dot(xa_ref[...], w1a_ref[...], preferred_element_type=jnp.float32)
         + b_ref[0:1, :])
    h = _leaky_relu(h)

    h = jnp.dot(h, w_ref[0], preferred_element_type=jnp.float32) + b_ref[1:2, :]
    h = _leaky_relu(h)

    h = jnp.dot(h, w_ref[1], preferred_element_type=jnp.float32) + b_ref[2:3, :]
    h = _leaky_relu(h)

    h = jnp.dot(h, w_ref[2], preferred_element_type=jnp.float32) + b_ref[3:4, :]
    o_ref[...] = jax.nn.sigmoid(h).astype(o_ref.dtype)


def discriminator_forward(encoded, future_action, params, *, max_tm=1024):
    """encoded: (B, S, E), future_action: (B, S, A). Returns (B, S, 1)."""
    B, S, E = encoded.shape
    A = future_action.shape[2]
    w1, b1, w2, b2, w3, b3, w4, b4 = params
    H = w1.shape[1]

    M = B * S
    # Row tiling: biggest tile up to max_tm (multiple of 8 sublanes); rows are
    # zero-padded so any (B, S) works (no `M % tm == 0` assert).
    tm = min(_round_up(M, 8), max_tm)
    M_pad = _round_up(M, tm)
    grid = (M_pad // tm,)

    # Lane padding: hidden / output feature dims -> HP (multiple of 128) so all
    # matmul operands and the output store are unmasked / lane-dense.  The
    # zero-padded weight rows/cols and zero biases keep the math identical.
    HP = max(_round_up(H, 128), 128)

    def pad2(w, rows, cols):
        w = w.astype(jnp.float32)
        return jnp.pad(w, ((0, rows - w.shape[0]), (0, cols - w.shape[1])))

    w1p = pad2(w1, E + A, HP)                         # (E+A, HP)
    w1e = w1p[:E]                                     # (E, HP)
    w1a = w1p[E:]                                     # (A, HP)
    w_stack = jnp.stack([pad2(w2, HP, HP),
                         pad2(w3, HP, HP),
                         pad2(w4, HP, HP)])           # (3, HP, HP)
    b_stack = jnp.stack(
        [jnp.pad(b.astype(jnp.float32).reshape(-1), (0, HP - b.size))
         for b in (b1, b2, b3, b4)])                  # (4, HP)

    def pad_rows(x):
        x2d = x.reshape(M, x.shape[2]).astype(jnp.float32)
        return jnp.pad(x2d, ((0, M_pad - M), (0, 0)))

    xe = pad_rows(encoded)          # (M_pad, E)
    xa = pad_rows(future_action)    # (M_pad, A)

    # Row-tiled activations; weights/biases are full, constant-index blocks.
    xe_spec = pl.BlockSpec((tm, E), lambda i: (i, 0))
    xa_spec = pl.BlockSpec((tm, A), lambda i: (i, 0))
    w1e_spec = pl.BlockSpec(w1e.shape, lambda i: (0, 0))
    w1a_spec = pl.BlockSpec(w1a.shape, lambda i: (0, 0))
    w_spec = pl.BlockSpec(w_stack.shape, lambda i: (0, 0, 0))
    b_spec = pl.BlockSpec(b_stack.shape, lambda i: (0, 0))
    o_spec = pl.BlockSpec((tm, HP), lambda i: (i, 0))

    out = pl.pallas_call(
        discriminator_mlp_kernel,
        out_shape=jax.ShapeDtypeStruct((M_pad, HP), jnp.float32),
        grid=grid,
        in_specs=[xe_spec, xa_spec, w1e_spec, w1a_spec, w_spec, b_spec],
        out_specs=o_spec,
        compiler_params=pltpu.CompilerParams(
            dimension_semantics=("parallel",)),
    )(xe, xa, w1e, w1a, w_stack, b_stack)

    return out[:M, :1].reshape(B, S, 1)


def init_discriminator_params(key, encoding_size, hidden_size, output_size):
    """Same shapes / init style as the PyTorch module's nn.Linear layers."""
    dims = [(output_size + encoding_size, hidden_size),
            (hidden_size, hidden_size // 2),
            (hidden_size // 2, hidden_size // 4),
            (hidden_size // 4, 1)]
    params = []
    for fan_in, fan_out in dims:
        kw, kb, key = jax.random.split(key, 3)
        bound = 1.0 / (fan_in ** 0.5)
        w = jax.random.uniform(kw, (fan_in, fan_out), jnp.float32, -bound, bound)
        b = jax.random.uniform(kb, (fan_out,), jnp.float32, -bound, bound)
        params += [w, b]
    return tuple(params)


if __name__ == "__main__":
    # Small shapes consistent with the module's forward.
    B, S = 2, 8
    encoding_size = 16
    hidden_size = 32
    output_size = 16   # feature dim of future_action (generator output size)

    key = jax.random.PRNGKey(0)
    k_enc, k_act, k_par = jax.random.split(key, 3)

    encoded = jax.random.normal(k_enc, (B, S, encoding_size), jnp.float32)
    future_action = jax.random.normal(k_act, (B, S, output_size), jnp.float32)
    params = init_discriminator_params(k_par, encoding_size, hidden_size,
                                       output_size)

    out = discriminator_forward(encoded, future_action, params)
    out = jax.block_until_ready(out)

    # Reference check: plain-JAX eval-mode forward of the same module.
    w1, b1, w2, b2, w3, b3, w4, b4 = params
    x = jnp.concatenate([encoded, future_action], axis=2)
    h = _leaky_relu(x @ w1 + b1)
    h = _leaky_relu(h @ w2 + b2)
    h = _leaky_relu(h @ w3 + b3)
    ref = jax.nn.sigmoid(h @ w4 + b4)

    assert out.shape == (B, S, 1), out.shape
    assert jnp.allclose(out, ref, atol=1e-5, rtol=1e-5), float(
        jnp.max(jnp.abs(out - ref)))

    print("KERNEL_OK")
</pallas_src>

<mosaic_0001>
module attributes {stable_mosaic.version = 11 : i64} {
  func.func @discriminator_mlp_kernel(%arg0: i32, %arg1: memref<16x16xf32, #tpu.memory_space<vmem>>, %arg2: memref<16x16xf32, #tpu.memory_space<vmem>>, %arg3: memref<16x128xf32, #tpu.memory_space<vmem>>, %arg4: memref<16x128xf32, #tpu.memory_space<vmem>>, %arg5: memref<3x128x128xf32, #tpu.memory_space<vmem>>, %arg6: memref<4x128xf32, #tpu.memory_space<vmem>>, %arg7: memref<16x128xf32, #tpu.memory_space<vmem>>) attributes {dimension_semantics = [#tpu.dimension_semantics<parallel>], iteration_bounds = array<i64: 1>, scalar_prefetch = 0 : i64, scratch_operands = 0 : i64, tpu.core_type = #tpu.core_type<tc>, window_params = [{transform_indices = @transform_0, window_bounds = array<i64: 16, 16>}, {transform_indices = @transform_1, window_bounds = array<i64: 16, 16>}, {pipeline_mode = #tpu.pipeline_mode<synchronous>, transform_indices = @transform_2, window_bounds = array<i64: 16, 128>}, {pipeline_mode = #tpu.pipeline_mode<synchronous>, transform_indices = @transform_3, window_bounds = array<i64: 16, 128>}, {pipeline_mode = #tpu.pipeline_mode<synchronous>, transform_indices = @transform_4, window_bounds = array<i64: 3, 128, 128>}, {pipeline_mode = #tpu.pipeline_mode<synchronous>, transform_indices = @transform_5, window_bounds = array<i64: 4, 128>}, {transform_indices = @transform_6, window_bounds = array<i64: 16, 128>}]} {
    %c0 = arith.constant 0 : index
    %c0_0 = arith.constant 0 : index
    %0 = vector.load %arg1[%c0, %c0_0] : memref<16x16xf32, #tpu.memory_space<vmem>>, vector<16x16xf32>
    %c0_1 = arith.constant 0 : index
    %c0_2 = arith.constant 0 : index
    %1 = vector.load %arg3[%c0_1, %c0_2] : memref<16x128xf32, #tpu.memory_space<vmem>>, vector<16x128xf32>
    %cst = arith.constant dense<0.000000e+00> : vector<16x128xf32>
    %2 = tpu.matmul %0, %1, %cst {dimension_numbers = #tpu.dot_dimension_numbers<[1], [0], [0], [1], [0, 0, 1, 1], [], []>} : vector<16x16xf32>, vector<16x128xf32>, vector<16x128xf32> -> vector<16x128xf32>
    %c0_3 = arith.constant 0 : index
    %c0_4 = arith.constant 0 : index
    %3 = vector.load %arg2[%c0_3, %c0_4] : memref<16x16xf32, #tpu.memory_space<vmem>>, vector<16x16xf32>
    %c0_5 = arith.constant 0 : index
    %c0_6 = arith.constant 0 : index
    %4 = vector.load %arg4[%c0_5, %c0_6] : memref<16x128xf32, #tpu.memory_space<vmem>>, vector<16x128xf32>
    %cst_7 = arith.constant dense<0.000000e+00> : vector<16x128xf32>
    %5 = tpu.matmul %3, %4, %cst_7 {dimension_numbers = #tpu.dot_dimension_numbers<[1], [0], [0], [1], [0, 0, 1, 1], [], []>} : vector<16x16xf32>, vector<16x128xf32>, vector<16x128xf32> -> vector<16x128xf32>
    %6 = arith.addf %2, %5 : vector<16x128xf32>
    %c0_8 = arith.constant 0 : index
    %c0_9 = arith.constant 0 : index
    %7 = vector.load %arg6[%c0_8, %c0_9] : memref<4x128xf32, #tpu.memory_space<vmem>>, vector<1x128xf32>
    %8 = vector.broadcast %7 : vector<1x128xf32> to vector<16x128xf32>
    %9 = arith.addf %6, %8 : vector<16x128xf32>
    %cst_10 = arith.constant 0.000000e+00 : f32
    %10 = vector.broadcast %cst_10 : f32 to vector<16x128xf32>
    %11 = arith.cmpf ogt, %9, %10 : vector<16x128xf32>
    %cst_11 = arith.constant 2.000000e-01 : f32
    %12 = vector.broadcast %cst_11 : f32 to vector<16x128xf32>
    %13 = arith.mulf %12, %9 : vector<16x128xf32>
    %14 = arith.select %11, %9, %13 : vector<16x128xi1>, vector<16x128xf32>
    %c0_12 = arith.constant 0 : index
    %c0_13 = arith.constant 0 : index
    %c0_14 = arith.constant 0 : index
    %15 = vector.load %arg5[%c0_12, %c0_13, %c0_14] : memref<3x128x128xf32, #tpu.memory_space<vmem>>, vector<1x128x128xf32>
    %16 = vector.shape_cast %15 : vector<1x128x128xf32> to vector<128x128xf32>
    %cst_15 = arith.constant dense<0.000000e+00> : vector<16x128xf32>
    %17 = tpu.matmul %14, %16, %cst_15 {dimension_numbers = #tpu.dot_dimension_numbers<[1], [0], [0], [1], [0, 0, 1, 1], [], []>} : vector<16x128xf32>, vector<128x128xf32>, vector<16x128xf32> -> vector<16x128xf32>
    %c1 = arith.constant 1 : index
    %c0_16 = arith.constant 0 : index
    %18 = vector.load %arg6[%c1, %c0_16] : memref<4x128xf32, #tpu.memory_space<vmem>>, vector<1x128xf32>
    %19 = vector.broadcast %18 : vector<1x128xf32> to vector<16x128xf32>
    %20 = arith.addf %17, %19 : vector<16x128xf32>
    %cst_17 = arith.constant 0.000000e+00 : f32
    %21 = vector.broadcast %cst_17 : f32 to vector<16x128xf32>
    %22 = arith.cmpf ogt, %20, %21 : vector<16x128xf32>
    %cst_18 = arith.constant 2.000000e-01 : f32
    %23 = vector.broadcast %cst_18 : f32 to vector<16x128xf32>
    %24 = arith.mulf %23, %20 : vector<16x128xf32>
    %25 = arith.select %22, %20, %24 : vector<16x128xi1>, vector<16x128xf32>
    %c1_19 = arith.constant 1 : index
    %c0_20 = arith.constant 0 : index
    %c0_21 = arith.constant 0 : index
    %26 = vector.load %arg5[%c1_19, %c0_20, %c0_21] : memref<3x128x128xf32, #tpu.memory_space<vmem>>, vector<1x128x128xf32>
    %27 = vector.shape_cast %26 : vector<1x128x128xf32> to vector<128x128xf32>
    %cst_22 = arith.constant dense<0.000000e+00> : vector<16x128xf32>
    %28 = tpu.matmul %25, %27, %cst_22 {dimension_numbers = #tpu.dot_dimension_numbers<[1], [0], [0], [1], [0, 0, 1, 1], [], []>} : vector<16x128xf32>, vector<128x128xf32>, vector<16x128xf32> -> vector<16x128xf32>
    %c2 = arith.constant 2 : index
    %c0_23 = arith.constant 0 : index
    %29 = vector.load %arg6[%c2, %c0_23] : memref<4x128xf32, #tpu.memory_space<vmem>>, vector<1x128xf32>
    %30 = vector.broadcast %29 : vector<1x128xf32> to vector<16x128xf32>
    %31 = arith.addf %28, %30 : vector<16x128xf32>
    %cst_24 = arith.constant 0.000000e+00 : f32
    %32 = vector.broadcast %cst_24 : f32 to vector<16x128xf32>
    %33 = arith.cmpf ogt, %31, %32 : vector<16x128xf32>
    %cst_25 = arith.constant 2.000000e-01 : f32
    %34 = vector.broadcast %cst_25 : f32 to vector<16x128xf32>
    %35 = arith.mulf %34, %31 : vector<16x128xf32>
    %36 = arith.select %33, %31, %35 : vector<16x128xi1>, vector<16x128xf32>
    %c2_26 = arith.constant 2 : index
    %c0_27 = arith.constant 0 : index
    %c0_28 = arith.constant 0 : index
    %37 = vector.load %arg5[%c2_26, %c0_27, %c0_28] : memref<3x128x128xf32, #tpu.memory_space<vmem>>, vector<1x128x128xf32>
    %38 = vector.shape_cast %37 : vector<1x128x128xf32> to vector<128x128xf32>
    %cst_29 = arith.constant dense<0.000000e+00> : vector<16x128xf32>
    %39 = tpu.matmul %36, %38, %cst_29 {dimension_numbers = #tpu.dot_dimension_numbers<[1], [0], [0], [1], [0, 0, 1, 1], [], []>} : vector<16x128xf32>, vector<128x128xf32>, vector<16x128xf32> -> vector<16x128xf32>
    %c3 = arith.constant 3 : index
    %c0_30 = arith.constant 0 : index
    %40 = vector.load %arg6[%c3, %c0_30] : memref<4x128xf32, #tpu.memory_space<vmem>>, vector<1x128xf32>
    %41 = vector.broadcast %40 : vector<1x128xf32> to vector<16x128xf32>
    %42 = arith.addf %39, %41 : vector<16x128xf32>
    %43 = arith.negf %42 : vector<16x128xf32>
    %44 = math.exp %43 : vector<16x128xf32>
    %cst_31 = arith.constant 1.000000e+00 : f32
    %45 = vector.broadcast %cst_31 : f32 to vector<16x128xf32>
    %46 = arith.addf %45, %44 : vector<16x128xf32>
    %47 = arith.divf %45, %46 : vector<16x128xf32>
    %c0_32 = arith.constant 0 : index
    %c0_33 = arith.constant 0 : index
    %48 = vector.load %arg7[%c0_32, %c0_33] : memref<16x128xf32, #tpu.memory_space<vmem>>, vector<16x128xf32>
    tpu.vector_store %arg7[%c0_32, %c0_33], %47 {strides = array<i32>} : memref<16x128xf32, #tpu.memory_space<vmem>>, vector<16x128xf32>,
    return
  }
  func.func @transform_0(%arg0: i32) -> (i32, i32) {
    %c0_i32 = arith.constant 0 : i32
    %c0_i32_0 = arith.constant 0 : i32
    return %arg0, %c0_i32 : i32, i32
  }
  func.func @transform_1(%arg0: i32) -> (i32, i32) {
    %c0_i32 = arith.constant 0 : i32
    %c0_i32_0 = arith.constant 0 : i32
    return %arg0, %c0_i32 : i32, i32
  }
  func.func @transform_2(%arg0: i32) -> (i32, i32) {
    %c0_i32 = arith.constant 0 : i32
    %c0_i32_0 = arith.constant 0 : i32
    %c0_i32_1 = arith.constant 0 : i32
    return %c0_i32, %c0_i32_0 : i32, i32
  }
  func.func @transform_3(%arg0: i32) -> (i32, i32) {
    %c0_i32 = arith.constant 0 : i32
    %c0_i32_0 = arith.constant 0 : i32
    %c0_i32_1 = arith.constant 0 : i32
    return %c0_i32, %c0_i32_0 : i32, i32
  }
  func.func @transform_4(%arg0: i32) -> (i32, i32, i32) {
    %c0_i32 = arith.constant 0 : i32
    %c0_i32_0 = arith.constant 0 : i32
    %c0_i32_1 = arith.constant 0 : i32
    %c0_i32_2 = arith.constant 0 : i32
    return %c0_i32, %c0_i32_0, %c0_i32_1 : i32, i32, i32
  }
  func.func @transform_5(%arg0: i32) -> (i32, i32) {
    %c0_i32 = arith.constant 0 : i32
    %c0_i32_0 = arith.constant 0 : i32
    %c0_i32_1 = arith.constant 0 : i32
    return %c0_i32, %c0_i32_0 : i32, i32
  }
  func.func @transform_6(%arg0: i32) -> (i32, i32) {
    %c0_i32 = arith.constant 0 : i32
    %c0_i32_0 = arith.constant 0 : i32
    return %arg0, %c0_i32 : i32, i32
  }
}

</mosaic_0001>

<llo_original>
// kernel: tpu_custom_call.1
$region0: #{tpu_custom_call.1}
  #allocation0 [shape = 'u32[]', space=smem, size = 0x4, offset = 0x4, fixed_abs, tag = 'smem constant byte address 0x4 - core index']
  #allocation1 [shape = 'u32[144,128]{1,0:T(1,128)}', space=vmem, size = 0x12000, scoped, tag = 'internal scratch']
  %s0 = inlined_call_operand.hbm [shape: f32[16,16], index: 0, kind: input, shape index: {}]
  %s1 = inlined_call_operand.hbm [shape: f32[16,16], index: 1, kind: input, shape index: {}]
  %s2 = inlined_call_operand.hbm [shape: f32[16,128], index: 2, kind: input, shape index: {}]
  %s3 = inlined_call_operand.hbm [shape: f32[16,128], index: 3, kind: input, shape index: {}]
  %s4 = inlined_call_operand.hbm [shape: f32[3,128,128], index: 4, kind: input, shape index: {}]
  %s5 = inlined_call_operand.vmem [shape: f32[4,128], index: 5, kind: input, shape index: {}]
  %s6 = inlined_call_operand.hbm [shape: f32[16,128], index: 6, kind: output, shape index: {}]
  %s7 = sld [smem:[#allocation0]]
  $region54: #{tpu_custom_call.1} parent=0
    _
  %s9 = ssub.s32 1, %s7
  %s10 = scalar_select 0, %s9, %s7
  $region1: #{tpu_custom_call.1} parent=0
    #allocation2 [shape = 'u8[8192]{0}', space=vmem, size = 0x2000, scoped, tag = 'input window, operand 0, single buffered']
    #allocation3 [shape = 's32[1]{0}', space=sflag, size = 0x4, scoped, tag = 'scoped memory for tpu_custom_call.1']
    #allocation4 [shape = 's32[1]{0}', space=sflag, size = 0x4, scoped, tag = 'scoped memory for tpu_custom_call.1']
    #allocation5 [shape = 'u8[8192]{0}', space=vmem, size = 0x2000, scoped, tag = 'input window, operand 1, single buffered']
    #allocation6 [shape = 's32[1]{0}', space=sflag, size = 0x4, scoped, tag = 'scoped memory for tpu_custom_call.1']
    #allocation7 [shape = 'u8[8192]{0}', space=vmem, size = 0x2000, scoped, tag = 'input window, operand 2, single buffered']
    #allocation8 [shape = 'u8[8192]{0}', space=vmem, size = 0x2000, scoped, tag = 'input window, operand 3, single buffered']
    #allocation9 [shape = 's32[1]{0}', space=sflag, size = 0x4, scoped, tag = 'scoped memory for tpu_custom_call.1']
    #allocation10 [shape = 'u8[196608]{0}', space=vmem, size = 0x30000, scoped, tag = 'input window, operand 4, single buffered']
    #allocation11 [shape = 'u8[8192]{0}', space=vmem, size = 0x2000, scoped, tag = 'output window, operand 0, single buffered']
    %11 = vsyncpa [#allocation3], 0
    %12 = vsyncpa [#allocation6], 0
    %13 = vsyncpa [#allocation9], 0
    %14 = vsyncpa [#allocation4], 0
    // Predicated region
    $region2: #{tpu_custom_call.1} parent=1 // pred_check
      _
    $region3: #{tpu_custom_call.1} parent=1 // pred_check_branch
      %16 = sbr.rel (0) target = $region5
    $region4: #{tpu_custom_call.1} parent=1 // pred_region
      %s18 = ssub.s32 256, 256
      %19 = vsyncadd [#allocation3], %s18
      %s20 = sshll.u32 [#allocation2], 4
      %s21 = int_to_ptr.vmem [resolvable:$true] %s20
      %26 = dma.hbm_to_vmem [thread:$0]  %s0, 256, %s21, [#allocation3], 128, 128, 8
    $region5: #{tpu_custom_call.1} parent=1 // pred_fallthru
      _
    // Predicated region
    $region6: #{tpu_custom_call.1} parent=1 // pred_check
      _
    $region7: #{tpu_custom_call.1} parent=1 // pred_check_branch
      %28 = sbr.rel (0) target = $region9
    $region8: #{tpu_custom_call.1} parent=1 // pred_region
      %s30 = ssub.s32 256, 256
      %31 = vsyncadd [#allocation6], %s30
      %s32 = sshll.u32 [#allocation5], 4
      %s33 = int_to_ptr.vmem [resolvable:$true] %s32
      %38 = dma.hbm_to_vmem [thread:$0]  %s1, 256, %s33, [#allocation6], 128, 128, 8
    $region9: #{tpu_custom_call.1} parent=1 // pred_fallthru
      _
    // Predicated region
    $region10: #{tpu_custom_call.1} parent=1 // pred_check
      _
    $region11: #{tpu_custom_call.1} parent=1 // pred_check_branch
      %40 = sbr.rel (0) target = $region13
    $region12: #{tpu_custom_call.1} parent=1 // pred_region
      %s42 = ssub.s32 256, 256
      %43 = vsyncadd [#allocation6], %s42
      %s44 = sshll.u32 [#allocation7], 4
      %s45 = int_to_ptr.vmem [resolvable:$true] %s44
      %50 = dma.hbm_to_vmem [thread:$0]  %s2, 256, %s45, [#allocation6], 128, 128, 8
    $region13: #{tpu_custom_call.1} parent=1 // pred_fallthru
      _
    // Predicated region
    $region14: #{tpu_custom_call.1} parent=1 // pred_check
      _
    $region15: #{tpu_custom_call.1} parent=1 // pred_check_branch
      %52 = sbr.rel (0) target = $region17
    $region16: #{tpu_custom_call.1} parent=1 // pred_region
      %s54 = ssub.s32 256, 256
      %55 = vsyncadd [#allocation9], %s54
      %s56 = sshll.u32 [#allocation8], 4
      %s57 = int_to_ptr.vmem [resolvable:$true] %s56
      %62 = dma.hbm_to_vmem [thread:$0]  %s3, 256, %s57, [#allocation9], 128, 128, 8
    $region17: #{tpu_custom_call.1} parent=1 // pred_fallthru
      _
    // Predicated region
    $region18: #{tpu_custom_call.1} parent=1 // pred_check
      _
    $region19: #{tpu_custom_call.1} parent=1 // pred_check_branch
      %64 = sbr.rel (0) target = $region21
    $region20: #{tpu_custom_call.1} parent=1 // pred_region
      %s66 = ssub.s32 6144, 6144
      %67 = vsyncadd [#allocation9], %s66
      %s68 = sshll.u32 [#allocation10], 4
      %s69 = int_to_ptr.vmem [resolvable:$true] %s68
      %74 = dma.hbm_to_vmem [thread:$0]  %s4, 6144, %s69, [#allocation9], 128, 128, 8
    $region21: #{tpu_custom_call.1} parent=1 // pred_fallthru
      _
    // Predicated region
    $region22: #{tpu_custom_call.1} parent=1 // pred_check
      _
    $region23: #{tpu_custom_call.1} parent=1 // pred_check_branch
      %76 = sbr.rel (0) target = $region25
    $region24: #{tpu_custom_call.1} parent=1 // pred_region
      _
    $region25: #{tpu_custom_call.1} parent=1 // pred_fallthru
      _
    // Predicated region
    $region26: #{tpu_custom_call.1} parent=1 // pred_check
      _
    $region27: #{tpu_custom_call.1} parent=1 // pred_check_branch
      %78 = sbr.rel (0) target = $region29
    $region28: #{tpu_custom_call.1} parent=1 // pred_region
      %79 = dma.done [#allocation3], 256
    $region29: #{tpu_custom_call.1} parent=1 // pred_fallthru
      _
    // Predicated region
    $region30: #{tpu_custom_call.1} parent=1 // pred_check
      _
    $region31: #{tpu_custom_call.1} parent=1 // pred_check_branch
      %81 = sbr.rel (0) target = $region33
    $region32: #{tpu_custom_call.1} parent=1 // pred_region
      %82 = dma.done [#allocation6], 256
    $region33: #{tpu_custom_call.1} parent=1 // pred_fallthru
      _
    // Predicated region
    $region34: #{tpu_custom_call.1} parent=1 // pred_check
      _
    $region35: #{tpu_custom_call.1} parent=1 // pred_check_branch
      %84 = sbr.rel (0) target = $region37
    $region36: #{tpu_custom_call.1} parent=1 // pred_region
      %85 = dma.done [#allocation6], 256
    $region37: #{tpu_custom_call.1} parent=1 // pred_fallthru
      _
    // Predicated region
    $region38: #{tpu_custom_call.1} parent=1 // pred_check
      _
    $region39: #{tpu_custom_call.1} parent=1 // pred_check_branch
      %87 = sbr.rel (0) target = $region41
    $region40: #{tpu_custom_call.1} parent=1 // pred_region
      %88 = dma.done [#allocation9], 256
    $region41: #{tpu_custom_call.1} parent=1 // pred_fallthru
      _
    // Predicated region
    $region42: #{tpu_custom_call.1} parent=1 // pred_check
      _
    $region43: #{tpu_custom_call.1} parent=1 // pred_check_branch
      %90 = sbr.rel (0) target = $region45
    $region44: #{tpu_custom_call.1} parent=1 // pred_region
      %91 = dma.done [#allocation9], 6144
    $region45: #{tpu_custom_call.1} parent=1 // pred_fallthru
      _
    %v92 = vld [vmem:[#allocation2] sm:$0xff]
    %v93 = vld [vmem:[#allocation2 + $0x8] sm:$0xff]
    %v94 = vld [vmem:[#allocation7] sm:$0xff]
    %v95 = vld [vmem:[#allocation7 + $0x8] sm:$0xff]
    %v96 = vld [vmem:[#allocation5] sm:$0xff]
    %v97 = vld [vmem:[#allocation5 + $0x8] sm:$0xff]
    %v98 = vld [vmem:[#allocation8] sm:$0xff]
    %v99 = vld [vmem:[#allocation8 + $0x8] sm:$0xff]
    %vm100 = vcmask 130048
    %v102 = vsel %vm100, %v96, 0
    %v105 = vsel %vm100, %v97, 0
    %107 = vmatprep.subr.mxu0 0.0
    %108 = vmatpush1.msra.mxu0 %v98
    %109 = vmatprep.subr.mxu0 0.0
    %110 = vmatpush1.msra.mxu0 %v99
    %111 = vmatprep.subr.mxu0 0.0
    %112 = vmatpush1.msra.mxu0 0.0
    %113 = vmatprep.subr.mxu0 0.0
    %114 = vmatpush1.msra.mxu0 0.0
    %115 = vmatprep.subr.mxu0 0.0
    %116 = vmatpush1.msra.mxu0 0.0
    %117 = vmatprep.subr.mxu0 0.0
    %118 = vmatpush1.msra.mxu0 0.0
    %119 = vmatprep.subr.mxu0 0.0
    %120 = vmatpush1.msra.mxu0 0.0
    %121 = vmatprep.subr.mxu0 0.0
    %122 = vmatpush1.msra.mxu0 0.0
    %123 = vmatprep.subr.mxu0 0.0
    %124 = vmatpush1.msra.mxu0 0.0
    %125 = vmatprep.subr.mxu0 0.0
    %126 = vmatpush1.msra.mxu0 0.0
    %127 = vmatprep.subr.mxu0 0.0
    %128 = vmatpush1.msra.mxu0 0.0
    %129 = vmatprep.subr.mxu0 0.0
    %130 = vmatpush1.msra.mxu0 0.0
    %131 = vmatprep.subr.mxu0 0.0
    %132 = vmatpush1.msra.mxu0 0.0
    %133 = vmatprep.subr.mxu0 0.0
    %134 = vmatpush1.msra.mxu0 0.0
    %135 = vmatprep.subr.mxu0 0.0
    %136 = vmatpush1.msra.mxu0 0.0
    %137 = vmatprep.subr.mxu0 0.0
    %138 = vmatpush1.msra.mxu0 0.0
    %139 = vmatprep.subr.mxu0 0.0
    %140 = vmatpush1.msra.mxu0 0.0
    %141 = vmatprep.subr.mxu0 0.0
    %142 = vmatpush1.msra.mxu0 0.0
    %143 = vmatprep.subr.mxu0 0.0
    %144 = vmatpush1.msra.mxu0 0.0
    %145 = vmatprep.subr.mxu0 0.0
    %146 = vmatpush1.msra.mxu0 0.0
    %147 = vmatprep.subr.mxu0 0.0
    %148 = vmatpush1.msra.mxu0 0.0
    %149 = vmatprep.subr.mxu0 0.0
    %150 = vmatpush1.msra.mxu0 0.0
    %151 = vmatprep.subr.mxu0 0.0
    %152 = vmatpush1.msra.mxu0 0.0
    %153 = vmatprep.subr.mxu0 0.0
    %154 = vmatpush1.msra.mxu0 0.0
    %155 = vmatprep.subr.mxu0 0.0
    %156 = vmatpush1.msra.mxu0 0.0
    %157 = vmatprep.subr.mxu0 0.0
    %158 = vmatpush1.msra.mxu0 0.0
    %159 = vmatprep.subr.mxu0 0.0
    %160 = vmatpush1.msra.mxu0 0.0
    %161 = vmatprep.subr.mxu0 0.0
    %162 = vmatpush1.msra.mxu0 0.0
    %163 = vmatprep.subr.mxu0 0.0
    %164 = vmatpush1.msra.mxu0 0.0
    %165 = vmatprep.subr.mxu0 0.0
    %166 = vmatpush1.msra.mxu0 0.0
    %167 = vmatprep.subr.mxu0 0.0
    %168 = vmatpush1.msra.mxu0 0.0
    %169 = vmatprep.subr.mxu0 0.0
    %170 = vmatpush1.msra.mxu0 0.0
    %171 = vmatprep.mubr.f32.mxu0 0.0
    %172 = vmatmul.mubr.f32.gmra.mrb[0].mxu0 %v102
    %v173 = vpop.f32.mrb[0].mxu0
    %v174 = vadd.f32 0.0, %v173
    %v175 = vpop.f32.mrb[0].mxu0
    %176 = vmatprep.mubr.f32.mxu0 0.0
    %177 = vmatmul.mubr.f32.gmra.mrb[0].mxu0 %v105
    %v178 = vpop.f32.mrb[0].mxu0
    %v179 = vadd.f32 0.0, %v178
    %v180 = vpop.f32.mrb[0].mxu0
    %181 = vdwg.mxu0
    %v183 = vsel %vm100, %v92, 0
    %v186 = vsel %vm100, %v93, 0
    %188 = vmatprep.subr.mxu0 0.0
    %189 = vmatpush1.msra.mxu0 %v94
    %190 = vmatprep.subr.mxu0 0.0
    %191 = vmatpush1.msra.mxu0 %v95
    %192 = vmatprep.subr.mxu0 0.0
    %193 = vmatpush1.msra.mxu0 0.0
    %194 = vmatprep.subr.mxu0 0.0
    %195 = vmatpush1.msra.mxu0 0.0
    %196 = vmatprep.subr.mxu0 0.0
    %197 = vmatpush1.msra.mxu0 0.0
    %198 = vmatprep.subr.mxu0 0.0
    %199 = vmatpush1.msra.mxu0 0.0
    %200 = vmatprep.subr.mxu0 0.0
    %201 = vmatpush1.msra.mxu0 0.0
    %202 = vmatprep.subr.mxu0 0.0
    %203 = vmatpush1.msra.mxu0 0.0
    %204 = vmatprep.subr.mxu0 0.0
    %205 = vmatpush1.msra.mxu0 0.0
    %206 = vmatprep.subr.mxu0 0.0
    %207 = vmatpush1.msra.mxu0 0.0
    %208 = vmatprep.subr.mxu0 0.0
    %209 = vmatpush1.msra.mxu0 0.0
    %210 = vmatprep.subr.mxu0 0.0
    %211 = vmatpush1.msra.mxu0 0.0
    %212 = vmatprep.subr.mxu0 0.0
    %213 = vmatpush1.msra.mxu0 0.0
    %214 = vmatprep.subr.mxu0 0.0
    %215 = vmatpush1.msra.mxu0 0.0
    %216 = vmatprep.subr.mxu0 0.0
    %217 = vmatpush1.msra.mxu0 0.0
    %218 = vmatprep.subr.mxu0 0.0
    %219 = vmatpush1.msra.mxu0 0.0
    %220 = vmatprep.subr.mxu0 0.0
    %221 = vmatpush1.msra.mxu0 0.0
    %222 = vmatprep.subr.mxu0 0.0
    %223 = vmatpush1.msra.mxu0 0.0
    %224 = vmatprep.subr.mxu0 0.0
    %225 = vmatpush1.msra.mxu0 0.0
    %226 = vmatprep.subr.mxu0 0.0
    %227 = vmatpush1.msra.mxu0 0.0
    %228 = vmatprep.subr.mxu0 0.0
    %229 = vmatpush1.msra.mxu0 0.0
    %230 = vmatprep.subr.mxu0 0.0
    %231 = vmatpush1.msra.mxu0 0.0
    %232 = vmatprep.subr.mxu0 0.0
    %233 = vmatpush1.msra.mxu0 0.0
    %234 = vmatprep.subr.mxu0 0.0
    %235 = vmatpush1.msra.mxu0 0.0
    %236 = vmatprep.subr.mxu0 0.0
    %237 = vmatpush1.msra.mxu0 0.0
    %238 = vmatprep.subr.mxu0 0.0
    %239 = vmatpush1.msra.mxu0 0.0
    %240 = vmatprep.subr.mxu0 0.0
    %241 = vmatpush1.msra.mxu0 0.0
    %242 = vmatprep.subr.mxu0 0.0
    %243 = vmatpush1.msra.mxu0 0.0
    %244 = vmatprep.subr.mxu0 0.0
    %245 = vmatpush1.msra.mxu0 0.0
    %246 = vmatprep.subr.mxu0 0.0
    %247 = vmatpush1.msra.mxu0 0.0
    %248 = vmatprep.subr.mxu0 0.0
    %249 = vmatpush1.msra.mxu0 0.0
    %250 = vmatprep.subr.mxu0 0.0
    %251 = vmatpush1.msra.mxu0 0.0
    %252 = vmatprep.mubr.f32.mxu0 0.0
    %253 = vmatmul.mubr.f32.gmra.mrb[0].mxu0 %v183
    %v254 = vpop.f32.mrb[0].mxu0
    %v255 = vadd.f32 %v174, %v254
    %v256 = vpop.f32.mrb[0].mxu0
    %257 = vmatprep.mubr.f32.mxu0 0.0
    %258 = vmatmul.mubr.f32.gmra.mrb[0].mxu0 %v186
    %v259 = vpop.f32.mrb[0].mxu0
    %v260 = vadd.f32 %v179, %v259
    %v261 = vpop.f32.mrb[0].mxu0
    %262 = vdwg.mxu0
    %v263 = vld [vmem:[%s5] sm:$0x1]
    %v264 = vlaneseq
    %v265 = vshrl.u32 %v264, 7
    %v266 = vsub.s32 0, %v265
    %v267 = vrot.slane %v263, %v266
    %v268 = vadd.f32 %v255, %v267
    %v269 = vadd.f32 %v260, %v267
    %vm270 = vcmp.gt.f32.partialorder %v268, 0.0
    %vm271 = vcmp.gt.f32.partialorder %v269, 0.0
    %v272 = vmul.f32 %v268, 0.2
    %v273 = vmul.f32 %v269, 0.2
    %v274 = vsel %vm270, %v268, %v272
    %v275 = vsel %vm271, %v269, %v273
    %v276 = vld [vmem:[#allocation10] sm:$0xff]
    %v277 = vld [vmem:[#allocation10 + $0x8] sm:$0xff]
    %v278 = vld [vmem:[#allocation10 + $0x10] sm:$0xff]
    %v279 = vld [vmem:[#allocation10 + $0x18] sm:$0xff]
    %v280 = vld [vmem:[#allocation10 + $0x20] sm:$0xff]
    %v281 = vld [vmem:[#allocation10 + $0x28] sm:$0xff]
    %v282 = vld [vmem:[#allocation10 + $0x30] sm:$0xff]
    %v283 = vld [vmem:[#allocation10 + $0x38] sm:$0xff]
    %v284 = vld [vmem:[#allocation10 + $0x40] sm:$0xff]
    %v285 = vld [vmem:[#allocation10 + $0x48] sm:$0xff]
    %v286 = vld [vmem:[#allocation10 + $0x50] sm:$0xff]
    %v287 = vld [vmem:[#allocation10 + $0x58] sm:$0xff]
    %v288 = vld [vmem:[#allocation10 + $0x60] sm:$0xff]
    %v289 = vld [vmem:[#allocation10 + $0x68] sm:$0xff]
    %v290 = vld [vmem:[#allocation10 + $0x70] sm:$0xff]
    %v291 = vld [vmem:[#allocation10 + $0x78] sm:$0xff]
    %v292 = vld [vmem:[%s5 + $0x1] sm:$0x1]
    %v293 = vlaneseq
    %v294 = vshrl.u32 %v293, 7
    %v295 = vsub.s32 0, %v294
    %v296 = vrot.slane %v292, %v295
    %297 = vmatprep.subr.mxu0 0.0
    %298 = vmatpush1.msra.mxu0 %v276
    %299 = vmatprep.subr.mxu0 0.0
    %300 = vmatpush1.msra.mxu0 %v277
    %301 = vmatprep.subr.mxu0 0.0
    %302 = vmatpush1.msra.mxu0 %v278
    %303 = vmatprep.subr.mxu0 0.0
    %304 = vmatpush1.msra.mxu0 %v279
    %305 = vmatprep.subr.mxu0 0.0
    %306 = vmatpush1.msra.mxu0 %v280
    %307 = vmatprep.subr.mxu0 0.0
    %308 = vmatpush1.msra.mxu0 %v281
    %309 = vmatprep.subr.mxu0 0.0
    %310 = vmatpush1.msra.mxu0 %v282
    %311 = vmatprep.subr.mxu0 0.0
    %312 = vmatpush1.msra.mxu0 %v283
    %313 = vmatprep.subr.mxu0 0.0
    %314 = vmatpush1.msra.mxu0 %v284
    %315 = vmatprep.subr.mxu0 0.0
    %316 = vmatpush1.msra.mxu0 %v285
    %317 = vmatprep.subr.mxu0 0.0
    %318 = vmatpush1.msra.mxu0 %v286
    %319 = vmatprep.subr.mxu0 0.0
    %320 = vmatpush1.msra.mxu0 %v287
    %321 = vmatprep.subr.mxu0 0.0
    %322 = vmatpush1.msra.mxu0 %v288
    %323 = vmatprep.subr.mxu0 0.0
    %324 = vmatpush1.msra.mxu0 %v289
    %325 = vmatprep.subr.mxu0 0.0
    %326 = vmatpush1.msra.mxu0 %v290
    %327 = vmatprep.subr.mxu0 0.0
    %328 = vmatpush1.msra.mxu0 %v291
    %329 = vmatprep.subr.mxu0 0.0
    %330 = vmatpush1.msra.mxu0 0.0
    %331 = vmatprep.subr.mxu0 0.0
    %332 = vmatpush1.msra.mxu0 0.0
    %333 = vmatprep.subr.mxu0 0.0
    %334 = vmatpush1.msra.mxu0 0.0
    %335 = vmatprep.subr.mxu0 0.0
    %336 = vmatpush1.msra.mxu0 0.0
    %337 = vmatprep.subr.mxu0 0.0
    %338 = vmatpush1.msra.mxu0 0.0
    %339 = vmatprep.subr.mxu0 0.0
    %340 = vmatpush1.msra.mxu0 0.0
    %341 = vmatprep.subr.mxu0 0.0
    %342 = vmatpush1.msra.mxu0 0.0
    %343 = vmatprep.subr.mxu0 0.0
    %344 = vmatpush1.msra.mxu0 0.0
    %345 = vmatprep.subr.mxu0 0.0
    %346 = vmatpush1.msra.mxu0 0.0
    %347 = vmatprep.subr.mxu0 0.0
    %348 = vmatpush1.msra.mxu0 0.0
    %349 = vmatprep.subr.mxu0 0.0
    %350 = vmatpush1.msra.mxu0 0.0
    %351 = vmatprep.subr.mxu0 0.0
    %352 = vmatpush1.msra.mxu0 0.0
    %353 = vmatprep.subr.mxu0 0.0
    %354 = vmatpush1.msra.mxu0 0.0
    %355 = vmatprep.subr.mxu0 0.0
    %356 = vmatpush1.msra.mxu0 0.0
    %357 = vmatprep.subr.mxu0 0.0
    %358 = vmatpush1.msra.mxu0 0.0
    %359 = vmatprep.subr.mxu0 0.0
    %360 = vmatpush1.msra.mxu0 0.0
    %361 = vmatprep.mubr.f32.mxu0 0.0
    %362 = vmatmul.mubr.f32.gmra.mrb[0].mxu0 %v274
    %v363 = vpop.f32.mrb[0].mxu0
    %v364 = vadd.f32 %v296, %v363
    %v365 = vpop.f32.mrb[0].mxu0
    %366 = vmatprep.mubr.f32.mxu0 0.0
    %367 = vmatmul.mubr.f32.gmra.mrb[0].mxu0 %v275
    %v368 = vpop.f32.mrb[0].mxu0
    %v369 = vadd.f32 %v296, %v368
    %v370 = vpop.f32.mrb[0].mxu0
    %371 = vdwg.mxu0
    %vm372 = vcmp.gt.f32.partialorder %v364, 0.0
    %vm373 = vcmp.gt.f32.partialorder %v369, 0.0
    %v374 = vmul.f32 %v364, 0.2
    %v375 = vmul.f32 %v369, 0.2
    %v376 = vsel %vm372, %v364, %v374
    %v377 = vsel %vm373, %v369, %v375
    %s378 = scalar_lea.vmem [#allocation10], 128
    %v379 = vld [vmem:[%s378] sm:$0xff]
    %v380 = vld [vmem:[%s378 + $0x8] sm:$0xff]
    %v381 = vld [vmem:[%s378 + $0x10] sm:$0xff]
    %v382 = vld [vmem:[%s378 + $0x18] sm:$0xff]
    %v383 = vld [vmem:[%s378 + $0x20] sm:$0xff]
    %v384 = vld [vmem:[%s378 + $0x28] sm:$0xff]
    %v385 = vld [vmem:[%s378 + $0x30] sm:$0xff]
    %v386 = vld [vmem:[%s378 + $0x38] sm:$0xff]
    %v387 = vld [vmem:[%s378 + $0x40] sm:$0xff]
    %v388 = vld [vmem:[%s378 + $0x48] sm:$0xff]
    %v389 = vld [vmem:[%s378 + $0x50] sm:$0xff]
    %v390 = vld [vmem:[%s378 + $0x58] sm:$0xff]
    %v391 = vld [vmem:[%s378 + $0x60] sm:$0xff]
    %v392 = vld [vmem:[%s378 + $0x68] sm:$0xff]
    %v393 = vld [vmem:[%s378 + $0x70] sm:$0xff]
    %v394 = vld [vmem:[%s378 + $0x78] sm:$0xff]
    %v395 = vld [vmem:[%s5 + $0x2] sm:$0x1]
    %v396 = vlaneseq
    %v397 = vshrl.u32 %v396, 7
    %v398 = vsub.s32 0, %v397
    %v399 = vrot.slane %v395, %v398
    %400 = vmatprep.subr.mxu0 0.0
    %401 = vmatpush1.msra.mxu0 %v379
    %402 = vmatprep.subr.mxu0 0.0
    %403 = vmatpush1.msra.mxu0 %v380
    %404 = vmatprep.subr.mxu0 0.0
    %405 = vmatpush1.msra.mxu0 %v381
    %406 = vmatprep.subr.mxu0 0.0
    %407 = vmatpush1.msra.mxu0 %v382
    %408 = vmatprep.subr.mxu0 0.0
    %409 = vmatpush1.msra.mxu0 %v383
    %410 = vmatprep.subr.mxu0 0.0
    %411 = vmatpush1.msra.mxu0 %v384
    %412 = vmatprep.subr.mxu0 0.0
    %413 = vmatpush1.msra.mxu0 %v385
    %414 = vmatprep.subr.mxu0 0.0
    %415 = vmatpush1.msra.mxu0 %v386
    %416 = vmatprep.subr.mxu0 0.0
    %417 = vmatpush1.msra.mxu0 %v387
    %418 = vmatprep.subr.mxu0 0.0
    %419 = vmatpush1.msra.mxu0 %v388
    %420 = vmatprep.subr.mxu0 0.0
    %421 = vmatpush1.msra.mxu0 %v389
    %422 = vmatprep.subr.mxu0 0.0
    %423 = vmatpush1.msra.mxu0 %v390
    %424 = vmatprep.subr.mxu0 0.0
    %425 = vmatpush1.msra.mxu0 %v391
    %426 = vmatprep.subr.mxu0 0.0
    %427 = vmatpush1.msra.mxu0 %v392
    %428 = vmatprep.subr.mxu0 0.0
    %429 = vmatpush1.msra.mxu0 %v393
    %430 = vmatprep.subr.mxu0 0.0
    %431 = vmatpush1.msra.mxu0 %v394
    %432 = vmatprep.subr.mxu0 0.0
    %433 = vmatpush1.msra.mxu0 0.0
    %434 = vmatprep.subr.mxu0 0.0
    %435 = vmatpush1.msra.mxu0 0.0
    %436 = vmatprep.subr.mxu0 0.0
    %437 = vmatpush1.msra.mxu0 0.0
    %438 = vmatprep.subr.mxu0 0.0
    %439 = vmatpush1.msra.mxu0 0.0
    %440 = vmatprep.subr.mxu0 0.0
    %441 = vmatpush1.msra.mxu0 0.0
    %442 = vmatprep.subr.mxu0 0.0
    %443 = vmatpush1.msra.mxu0 0.0
    %444 = vmatprep.subr.mxu0 0.0
    %445 = vmatpush1.msra.mxu0 0.0
    %446 = vmatprep.subr.mxu0 0.0
    %447 = vmatpush1.msra.mxu0 0.0
    %448 = vmatprep.subr.mxu0 0.0
    %449 = vmatpush1.msra.mxu0 0.0
    %450 = vmatprep.subr.mxu0 0.0
    %451 = vmatpush1.msra.mxu0 0.0
    %452 = vmatprep.subr.mxu0 0.0
    %453 = vmatpush1.msra.mxu0 0.0
    %454 = vmatprep.subr.mxu0 0.0
    %455 = vmatpush1.msra.mxu0 0.0
    %456 = vmatprep.subr.mxu0 0.0
    %457 = vmatpush1.msra.mxu0 0.0
    %458 = vmatprep.subr.mxu0 0.0
    %459 = vmatpush1.msra.mxu0 0.0
    %460 = vmatprep.subr.mxu0 0.0
    %461 = vmatpush1.msra.mxu0 0.0
    %462 = vmatprep.subr.mxu0 0.0
    %463 = vmatpush1.msra.mxu0 0.0
    %464 = vmatprep.mubr.f32.mxu0 0.0
    %465 = vmatmul.mubr.f32.gmra.mrb[0].mxu0 %v376
    %v466 = vpop.f32.mrb[0].mxu0
    %v467 = vadd.f32 %v399, %v466
    %v468 = vpop.f32.mrb[0].mxu0
    %469 = vmatprep.mubr.f32.mxu0 0.0
    %470 = vmatmul.mubr.f32.gmra.mrb[0].mxu0 %v377
    %v471 = vpop.f32.mrb[0].mxu0
    %v472 = vadd.f32 %v399, %v471
    %v473 = vpop.f32.mrb[0].mxu0
    %474 = vdwg.mxu0
    %vm475 = vcmp.gt.f32.partialorder %v467, 0.0
    %vm476 = vcmp.gt.f32.partialorder %v472, 0.0
    %v477 = vmul.f32 %v467, 0.2
    %v478 = vmul.f32 %v472, 0.2
    %v479 = vsel %vm475, %v467, %v477
    %v480 = vsel %vm476, %v472, %v478
    %s481 = scalar_lea.vmem [#allocation10], 256
    %v482 = vld [vmem:[%s481] sm:$0xff]
    %v483 = vld [vmem:[%s481 + $0x8] sm:$0xff]
    %v484 = vld [vmem:[%s481 + $0x10] sm:$0xff]
    %v485 = vld [vmem:[%s481 + $0x18] sm:$0xff]
    %v486 = vld [vmem:[%s481 + $0x20] sm:$0xff]
    %v487 = vld [vmem:[%s481 + $0x28] sm:$0xff]
    %v488 = vld [vmem:[%s481 + $0x30] sm:$0xff]
    %v489 = vld [vmem:[%s481 + $0x38] sm:$0xff]
    %v490 = vld [vmem:[%s481 + $0x40] sm:$0xff]
    %v491 = vld [vmem:[%s481 + $0x48] sm:$0xff]
    %v492 = vld [vmem:[%s481 + $0x50] sm:$0xff]
    %v493 = vld [vmem:[%s481 + $0x58] sm:$0xff]
    %v494 = vld [vmem:[%s481 + $0x60] sm:$0xff]
    %v495 = vld [vmem:[%s481 + $0x68] sm:$0xff]
    %v496 = vld [vmem:[%s481 + $0x70] sm:$0xff]
    %v497 = vld [vmem:[%s481 + $0x78] sm:$0xff]
    %v498 = vld [vmem:[%s5 + $0x3] sm:$0x1]
    %v499 = vlaneseq
    %v500 = vshrl.u32 %v499, 7
    %v501 = vsub.s32 0, %v500
    %v502 = vrot.slane %v498, %v501
    %503 = vmatprep.subr.mxu0 0.0
    %504 = vmatpush1.msra.mxu0 %v482
    %505 = vmatprep.subr.mxu0 0.0
    %506 = vmatpush1.msra.mxu0 %v483
    %507 = vmatprep.subr.mxu0 0.0
    %508 = vmatpush1.msra.mxu0 %v484
    %509 = vmatprep.subr.mxu0 0.0
    %510 = vmatpush1.msra.mxu0 %v485
    %511 = vmatprep.subr.mxu0 0.0
    %512 = vmatpush1.msra.mxu0 %v486
    %513 = vmatprep.subr.mxu0 0.0
    %514 = vmatpush1.msra.mxu0 %v487
    %515 = vmatprep.subr.mxu0 0.0
    %516 = vmatpush1.msra.mxu0 %v488
    %517 = vmatprep.subr.mxu0 0.0
    %518 = vmatpush1.msra.mxu0 %v489
    %519 = vmatprep.subr.mxu0 0.0
    %520 = vmatpush1.msra.mxu0 %v490
    %521 = vmatprep.subr.mxu0 0.0
    %522 = vmatpush1.msra.mxu0 %v491
    %523 = vmatprep.subr.mxu0 0.0
    %524 = vmatpush1.msra.mxu0 %v492
    %525 = vmatprep.subr.mxu0 0.0
    %526 = vmatpush1.msra.mxu0 %v493
    %527 = vmatprep.subr.mxu0 0.0
    %528 = vmatpush1.msra.mxu0 %v494
    %529 = vmatprep.subr.mxu0 0.0
    %530 = vmatpush1.msra.mxu0 %v495
    %531 = vmatprep.subr.mxu0 0.0
    %532 = vmatpush1.msra.mxu0 %v496
    %533 = vmatprep.subr.mxu0 0.0
    %534 = vmatpush1.msra.mxu0 %v497
    %535 = vmatprep.subr.mxu0 0.0
    %536 = vmatpush1.msra.mxu0 0.0
    %537 = vmatprep.subr.mxu0 0.0
    %538 = vmatpush1.msra.mxu0 0.0
    %539 = vmatprep.subr.mxu0 0.0
    %540 = vmatpush1.msra.mxu0 0.0
    %541 = vmatprep.subr.mxu0 0.0
    %542 = vmatpush1.msra.mxu0 0.0
    %543 = vmatprep.subr.mxu0 0.0
    %544 = vmatpush1.msra.mxu0 0.0
    %545 = vmatprep.subr.mxu0 0.0
    %546 = vmatpush1.msra.mxu0 0.0
    %547 = vmatprep.subr.mxu0 0.0
    %548 = vmatpush1.msra.mxu0 0.0
    %549 = vmatprep.subr.mxu0 0.0
    %550 = vmatpush1.msra.mxu0 0.0
    %551 = vmatprep.subr.mxu0 0.0
    %552 = vmatpush1.msra.mxu0 0.0
    %553 = vmatprep.subr.mxu0 0.0
    %554 = vmatpush1.msra.mxu0 0.0
    %555 = vmatprep.subr.mxu0 0.0
    %556 = vmatpush1.msra.mxu0 0.0
    %557 = vmatprep.subr.mxu0 0.0
    %558 = vmatpush1.msra.mxu0 0.0
    %559 = vmatprep.subr.mxu0 0.0
    %560 = vmatpush1.msra.mxu0 0.0
    %561 = vmatprep.subr.mxu0 0.0
    %562 = vmatpush1.msra.mxu0 0.0
    %563 = vmatprep.subr.mxu0 0.0
    %564 = vmatpush1.msra.mxu0 0.0
    %565 = vmatprep.subr.mxu0 0.0
    %566 = vmatpush1.msra.mxu0 0.0
    %567 = vmatprep.mubr.f32.mxu0 0.0
    %568 = vmatmul.mubr.f32.gmra.mrb[0].mxu0 %v479
    %v569 = vpop.f32.mrb[0].mxu0
    %v570 = vadd.f32 %v502, %v569
    %v571 = vpop.f32.mrb[0].mxu0
    %572 = vmatprep.mubr.f32.mxu0 0.0
    %573 = vmatmul.mubr.f32.gmra.mrb[0].mxu0 %v480
    %v574 = vpop.f32.mrb[0].mxu0
    %v575 = vadd.f32 %v502, %v574
    %v576 = vpop.f32.mrb[0].mxu0
    %577 = vdwg.mxu0
    %v578 = vxor.u32 %v570, 2147483648
    %v579 = vxor.u32 %v575, 2147483648
    %v580 = vmul.f32 %v578, 1.442695
    %v581 = vpow.pop %v580
    %v582 = vmul.f32 %v579, 1.442695
    %v583 = vpow.pop %v582
    %v584 = vadd.f32 %v581, 1.0
    %v585 = vadd.f32 %v583, 1.0
    %v586 = vrcp.pop %v584
    %v587 = vmul.f32 1.0, %v586
    %v588 = vrcp.pop %v585
    %v589 = vmul.f32 1.0, %v588
    %590 = vst [vmem:[#allocation11] sm:$0xff] %v587
    %591 = vst [vmem:[#allocation11 + $0x8] sm:$0xff] %v589
    // Predicated region
    $region46: #{tpu_custom_call.1} parent=1 // pred_check
      _
    $region47: #{tpu_custom_call.1} parent=1 // pred_check_branch
      %593 = sbr.rel (0) target = $region49
    $region48: #{tpu_custom_call.1} parent=1 // pred_region
      %s595 = ssub.s32 256, 256
      %596 = vsyncadd [#allocation4], %s595
      %s597 = sshll.u32 [#allocation11], 4
      %s598 = int_to_ptr.vmem [resolvable:$true] %s597
      %603 = dma.vmem_to_hbm [thread:$0]  %s598, 256, %s6, [#allocation4], 128, 128, 8
    $region49: #{tpu_custom_call.1} parent=1 // pred_fallthru
      _
    // Predicated region
    $region50: #{tpu_custom_call.1} parent=1 // pred_check
      _
    $region51: #{tpu_custom_call.1} parent=1 // pred_check_branch
      %605 = sbr.rel (0) target = $region53
    $region52: #{tpu_custom_call.1} parent=1 // pred_region
      %606 = dma.done [#allocation4], 256
    $region53: #{tpu_custom_call.1} parent=1 // pred_fallthru
      _
    %607 = vsyncpa [#allocation3], 1
    %608 = vsyncpa [#allocation6], 1
    %609 = vsyncpa [#allocation9], 1
    %610 = vsyncpa [#allocation4], 1

</llo_original>
